<compile_context>
chip_gen: v7x
topology: tpu7x:2x2x1
jax: 0.10.0
libtpu: 0.0.40
codegen_flags: <defaults>
</compile_context>

<pallas_src>
import functools

import jax
import jax.numpy as jnp
import numpy as np
from jax.experimental import pallas as pl
from jax.experimental.pallas import tpu as pltpu


def _conv_relu_kernel(x_ref, w_ref, b_ref, o_ref, xpad_ref, *,
                      stride, kh, kw, pad, row_tile, w_out, groups, t_tiles):
    """One (batch, output-row-tile) grid step: im2col conv + bias + ReLU.

    x_ref   : (H, W, Cin)            full NHWC image of this batch element
                                     (block index ignores the row-tile axis, so
                                     it is only re-fetched when `b` changes)
    w_ref   : (G, Cout_g, KK)        im2col weights, resident across the grid
    b_ref   : (G, Cout_g, 1)         f32 bias, resident across the grid
    o_ref   : (Cout, M_tile)         lane-dense output tile, M_tile = row_tile*W_out
    xpad_ref: (span_rows, W+2p, Cin) padded row-tile scratch (compute dtype)
    """
    h_in, w_in, cin = x_ref.shape
    cout = o_ref.shape[0]
    cin_g = cin // groups
    cout_g = cout // groups
    span_rows, wp, _ = xpad_ref.shape
    m_tile = row_tile * w_out
    kk = kh * kw * cin_g
    cdtype = xpad_ref.dtype

    t = pl.program_id(1)
    r0 = t * (row_tile * stride) - pad       # first (unpadded) input row of this tile

    # ---- fill the padded row-tile scratch ------------------------------------
    # Everything this tile reads is rewritten every step, so correctness does not
    # depend on grid order / megacore splitting of the (parallel, parallel) grid.
    if pad > 0:                              # tiny left/right zero strips
        zstrip = jnp.zeros((span_rows, pad, cin), cdtype)
        xpad_ref[:, 0:pad, :] = zstrip
        xpad_ref[:, pad + w_in:wp, :] = zstrip

    # Rows that are in-range for *every* tile index: one dynamic-start bulk copy.
    lo = min(pad, span_rows)
    hi = max(lo, min(span_rows, h_in + pad - (t_tiles - 1) * row_tile * stride))
    if hi > lo:
        xpad_ref[lo:hi, pad:pad + w_in, :] = x_ref[pl.ds(r0 + lo, hi - lo), :, :]
    # Edge (halo) rows -- at most `pad` on each side: clamped read + zero mask.
    for i in [r for r in range(span_rows) if r < lo or r >= hi]:
        src = r0 + i
        valid = jnp.logical_and(src >= 0, src < h_in)
        row = x_ref[pl.ds(jnp.clip(src, 0, h_in - 1), 1), :, :]
        xpad_ref[i:i + 1, pad:pad + w_in, :] = jnp.where(valid, row,
                                                         jnp.zeros_like(row))

    # ---- im2col + one MXU matmul + bias + ReLU per group ----------------------
    for g in range(groups):                  # static unroll; groups is small
        c0 = g * cin_g
        taps = []
        for i in range(kh):
            for j in range(kw):
                if stride == 1:
                    win = xpad_ref[i:i + row_tile, j:j + w_out, c0:c0 + cin_g]
                else:
                    # TODO(synk): strided configs use strided ref reads but are
                    # not exercised by the self-test (M may also not be 128-aligned).
                    win = xpad_ref[pl.ds(i, row_tile, stride),
                                   pl.ds(j, w_out, stride),
                                   c0:c0 + cin_g]
                taps.append(win)             # (row_tile, W_out, Cin_g)
        # TODO(synk): when Cin_g % 128 != 0 this concat is lane-misaligned; A/B the
        # per-tap accumulate-matmul variant (no patches materialization) and a
        # pltpu.roll-based j-shift per layer shape from a bundle dump.
        patches = jnp.concatenate(taps, axis=-1)          # (row_tile, W_out, KK)
        # Collapse the two *leading* dims only; the sublane axis is W_out, so this
        # reshape is relayout-free when W_out % 8 == 0 (true for EE_Net shapes).
        patches = patches.reshape(m_tile, kk)

        w_mat = w_ref[g]                                   # (Cout_g, KK)
        # (Cout_g, KK) x (M_tile, KK)^T -> (Cout_g, M_tile): flash-attn q@k^T
        # contraction; the big patches operand is the MXU's transposed RHS (the
        # small weight matrix is the other side), lane-dense f32 accumulator.
        # TODO(synk): confirm no XLU transpose with pl.lower_as_mlir at real sizes.
        acc = jax.lax.dot_general(
            w_mat, patches,
            dimension_numbers=(((1,), (1,)), ((), ())),
            preferred_element_type=jnp.float32)

        acc = jnp.maximum(acc + b_ref[g], 0.0)             # bias + ReLU, f32 epilogue
        o_ref[g * cout_g:(g + 1) * cout_g, :] = acc.astype(o_ref.dtype)


def _pick_row_tile(h_out, w_out, kk, cout, itemsize):
    """Row-tile height: divides H_out, keeps M_tile lane-aligned (multiple of 128
    unless it is the whole image), targets >=512 lanes, and bounds the per-tile
    patches/acc VMEM to a few MiB so double-buffered pipelining survives."""
    divisors = [d for d in range(1, h_out + 1) if h_out % d == 0]

    def legal(th):
        return th == h_out or (th * w_out) % 128 == 0

    def fits(th):
        m = th * w_out
        return 2 * m * kk * itemsize + m * cout * 4 <= 8 * 1024 * 1024

    for th in divisors:                       # smallest tile reaching 512 lanes
        if legal(th) and fits(th) and th * w_out >= 512:
            return th
    cand = [d for d in divisors if legal(d) and fits(d)]
    return cand[-1] if cand else h_out


def cnn_block_forward(x, weight, bias, *, stride, padding, groups=1,
                      compute_dtype=None, row_tile=None):
    """Equivalent of CNNBlock.forward: Conv2d(..., groups) -> ReLU, NCHW in/out."""
    n, cin, h, w = x.shape
    cout, cin_g, kh, kw = weight.shape
    assert cin_g * groups == cin and cout % groups == 0
    cout_g = cout // groups
    kk = kh * kw * cin_g
    h_out = (h + 2 * padding - kh) // stride + 1
    w_out = (w + 2 * padding - kw) // stride + 1
    out_dtype = x.dtype
    cdtype = jnp.dtype(compute_dtype) if compute_dtype is not None else jnp.dtype(x.dtype)
    itemsize = cdtype.itemsize

    if row_tile is None:
        row_tile = _pick_row_tile(h_out, w_out, kk, cout, itemsize)
    assert h_out % row_tile == 0, "row_tile must divide H_out"
    assert row_tile == h_out or (row_tile * w_out) % 128 == 0, \
        "tiled output blocks must stay lane-aligned (multiple of 128)"
    t_tiles = h_out // row_tile
    m_tile = row_tile * w_out
    span_rows = (row_tile - 1) * stride + kh
    wp = w + 2 * padding

    # Single layout conversion at the model boundary (kernel is NHWC-native); the
    # (N, Cout, H_out*W_out) kernel output is NCHW after a *free* reshape.
    x_nhwc = jnp.transpose(x, (0, 2, 3, 1)).astype(cdtype)            # (N, H, W, Cin)
    # im2col weights: w_mat[g, o, (i*KW + j)*Cin_g + c] = weight[g*Cout_g+o, c, i, j]
    w_mat = jnp.transpose(weight, (0, 2, 3, 1)).reshape(groups, cout_g, kk).astype(cdtype)
    b = bias.astype(jnp.float32).reshape(groups, cout_g, 1)

    kernel = functools.partial(
        _conv_relu_kernel, stride=stride, kh=kh, kw=kw, pad=padding,
        row_tile=row_tile, w_out=w_out, groups=groups, t_tiles=t_tiles)

    # Explicit VMEM budget (defaults are only 16/32 MiB scoped); capped at 64 MiB
    # so the same configuration also fits v7x's smaller physical VMEM.
    est = (2 * h * w * cin * itemsize                                 # x block (2 bufs)
           + 2 * groups * cout_g * kk * itemsize                      # resident weights
           + 2 * groups * cout_g * 4                                  # resident bias
           + 2 * cout * m_tile * jnp.dtype(out_dtype).itemsize        # out tile (2 bufs)
           + span_rows * wp * cin * itemsize                          # padded scratch
           + 2 * m_tile * kk * itemsize                               # taps + patches
           + cout_g * m_tile * 4)                                     # f32 accumulator
    vmem_limit = int(min(64 * 1024 * 1024, max(32 * 1024 * 1024, 2 * est)))

    out = pl.pallas_call(
        kernel,
        out_shape=jax.ShapeDtypeStruct((n, cout, h_out * w_out), out_dtype),
        grid=(n, t_tiles),
        in_specs=[
            pl.BlockSpec((None, h, w, cin), lambda b_, t_: (b_, 0, 0, 0)),
            pl.BlockSpec((groups, cout_g, kk), lambda b_, t_: (0, 0, 0)),   # resident
            pl.BlockSpec((groups, cout_g, 1), lambda b_, t_: (0, 0, 0)),    # resident
        ],
        out_specs=pl.BlockSpec((None, cout, m_tile), lambda b_, t_: (b_, 0, t_)),
        scratch_shapes=[pltpu.VMEM((span_rows, wp, cin), cdtype)],
        compiler_params=pltpu.CompilerParams(
            # Both axes parallel: even at N=1 the row-tile axis feeds both v7x TCs.
            dimension_semantics=("parallel", "parallel"),
            vmem_limit_bytes=vmem_limit),
        # TODO(synk): for very large inputs, switch x to memory_space=pl.ANY and DMA
        # only this tile's halo rows straight into xpad_ref (frees the double-
        # buffered full-image x block and its VPU copy pass).
    )(x_nhwc, w_mat, b)

    return out.reshape(n, cout, h_out, w_out)     # NCHW, reshape only (no transpose)


def _reference(x, weight, bias, stride, padding, groups):
    out = jax.lax.conv_general_dilated(
        x, weight, window_strides=(stride, stride),
        padding=[(padding, padding), (padding, padding)],
        dimension_numbers=("NCHW", "OIHW", "NCHW"),
        feature_group_count=groups)
    return jnp.maximum(out + bias[None, :, None, None], 0.0)


if __name__ == "__main__":
    # CNNBlock(in_channels=4, out_channels=8, kernel_size=3, stride=1, padding=1)
    N, CIN, H, W, COUT = 2, 4, 16, 16, 8

    key = jax.random.PRNGKey(0)
    k1, k2, k3, k4, k5, k6, k7 = jax.random.split(key, 7)
    x = jax.random.normal(k1, (N, CIN, H, W), jnp.float32)

    # ---- K=3, pad=1, groups=1, f32, explicit 2-way row tiling ------------------
    w1 = jax.random.normal(k2, (COUT, CIN, 3, 3), jnp.float32) * 0.1
    b1 = jax.random.normal(k3, (COUT,), jnp.float32) * 0.1
    out = jax.block_until_ready(
        cnn_block_forward(x, w1, b1, stride=1, padding=1, groups=1, row_tile=8))
    ref = _reference(x, w1, b1, 1, 1, 1)
    assert out.shape == ref.shape == (N, COUT, H, W)
    np.testing.assert_allclose(np.asarray(out), np.asarray(ref), atol=1e-4, rtol=1e-4)

    # ---- same layer, automatic row-tile selection ------------------------------
    out_auto = jax.block_until_ready(
        cnn_block_forward(x, w1, b1, stride=1, padding=1, groups=1))
    np.testing.assert_allclose(np.asarray(out_auto), np.asarray(ref),
                               atol=1e-4, rtol=1e-4)

    # ---- grouped conv (groups=2), f32, row-tiled --------------------------------
    G2 = 2
    w2 = jax.random.normal(k4, (COUT, CIN // G2, 3, 3), jnp.float32) * 0.1
    b2 = jax.random.normal(k5, (COUT,), jnp.float32) * 0.1
    out2 = jax.block_until_ready(
        cnn_block_forward(x, w2, b2, stride=1, padding=1, groups=G2, row_tile=8))
    np.testing.assert_allclose(np.asarray(out2),
                               np.asarray(_reference(x, w2, b2, 1, 1, G2)),
                               atol=1e-4, rtol=1e-4)

    # ---- K=5, pad=2 (two halo rows per side handled inside the kernel) ---------
    w3 = jax.random.normal(k6, (COUT, CIN, 5, 5), jnp.float32) * 0.1
    b3 = jax.random.normal(k7, (COUT,), jnp.float32) * 0.1
    out3 = jax.block_until_ready(
        cnn_block_forward(x, w3, b3, stride=1, padding=2, groups=1, row_tile=8))
    np.testing.assert_allclose(np.asarray(out3),
                               np.asarray(_reference(x, w3, b3, 1, 2, 1)),
                               atol=1e-4, rtol=1e-4)

    # ---- 1x1 conv, padding=0 (no halo path) ------------------------------------
    w4 = jax.random.normal(k4, (COUT, CIN, 1, 1), jnp.float32) * 0.1
    out4 = jax.block_until_ready(
        cnn_block_forward(x, w4, b1, stride=1, padding=0, groups=1))
    np.testing.assert_allclose(np.asarray(out4),
                               np.asarray(_reference(x, w4, b1, 1, 0, 1)),
                               atol=1e-4, rtol=1e-4)

    # ---- bf16 MXU inputs / f32 accumulation (v6e / v7x production dtype) -------
    out_bf16 = jax.block_until_ready(
        cnn_block_forward(x, w1, b1, stride=1, padding=1, groups=1,
                          compute_dtype=jnp.bfloat16, row_tile=8))
    np.testing.assert_allclose(np.asarray(out_bf16), np.asarray(ref),
                               atol=5e-2, rtol=5e-2)

    print("KERNEL_OK")
</pallas_src>

<mosaic_0001>
module attributes {stable_mosaic.version = 11 : i64} {
  func.func @_conv_relu_kernel(%arg0: i32, %arg1: i32, %arg2: memref<1x16x16x4xf32, #tpu.memory_space<vmem>>, %arg3: memref<1x8x36xf32, #tpu.memory_space<vmem>>, %arg4: memref<1x8x1xf32, #tpu.memory_space<vmem>>, %arg5: memref<1x8x128xf32, #tpu.memory_space<vmem>>, %arg6: memref<10x18x4xf32, #tpu.memory_space<vmem>>) attributes {dimension_semantics = [#tpu.dimension_semantics<parallel>, #tpu.dimension_semantics<parallel>], iteration_bounds = array<i64: 2, 2>, scalar_prefetch = 0 : i64, scratch_operands = 1 : i64, tpu.core_type = #tpu.core_type<tc>, window_params = [{transform_indices = @transform_0, window_bounds = array<i64: 1, 16, 16, 4>}, {pipeline_mode = #tpu.pipeline_mode<synchronous>, transform_indices = @transform_1, window_bounds = array<i64: 1, 8, 36>}, {pipeline_mode = #tpu.pipeline_mode<synchronous>, transform_indices = @transform_2, window_bounds = array<i64: 1, 8, 1>}, {transform_indices = @transform_3, window_bounds = array<i64: 1, 8, 128>}]} {
    %c8_i32 = arith.constant 8 : i32
    %0 = arith.muli %arg1, %c8_i32 : i32
    %c1_i32 = arith.constant 1 : i32
    %1 = arith.subi %0, %c1_i32 : i32
    %cst = arith.constant 0.000000e+00 : f32
    %2 = vector.broadcast %cst : f32 to vector<10x1x4xf32>
    %c0 = arith.constant 0 : index
    %c0_0 = arith.constant 0 : index
    %c0_1 = arith.constant 0 : index
    %3 = vector.load %arg6[%c0, %c0_0, %c0_1] : memref<10x18x4xf32, #tpu.memory_space<vmem>>, vector<10x1x4xf32>
    tpu.vector_store %arg6[%c0, %c0_0, %c0_1], %2 {strides = array<i32>} : memref<10x18x4xf32, #tpu.memory_space<vmem>>, vector<10x1x4xf32>,
    %c0_2 = arith.constant 0 : index
    %c17 = arith.constant 17 : index
    %c0_3 = arith.constant 0 : index
    %4 = vector.load %arg6[%c0_2, %c17, %c0_3] : memref<10x18x4xf32, #tpu.memory_space<vmem>>, vector<10x1x4xf32>
    tpu.vector_store %arg6[%c0_2, %c17, %c0_3], %2 {strides = array<i32>} : memref<10x18x4xf32, #tpu.memory_space<vmem>>, vector<10x1x4xf32>,
    %c1_i32_4 = arith.constant 1 : i32
    %5 = arith.addi %1, %c1_i32_4 : i32
    %c0_5 = arith.constant 0 : index
    %6 = arith.index_cast %5 : i32 to index
    %c0_6 = arith.constant 0 : index
    %c0_7 = arith.constant 0 : index
    %7 = vector.load %arg2[%c0_5, %6, %c0_6, %c0_7] : memref<1x16x16x4xf32, #tpu.memory_space<vmem>>, vector<1x8x16x4xf32>
    %8 = vector.shape_cast %7 : vector<1x8x16x4xf32> to vector<8x16x4xf32>
    %c1 = arith.constant 1 : index
    %c1_8 = arith.constant 1 : index
    %c0_9 = arith.constant 0 : index
    %9 = vector.load %arg6[%c1, %c1_8, %c0_9] : memref<10x18x4xf32, #tpu.memory_space<vmem>>, vector<8x16x4xf32>
    tpu.vector_store %arg6[%c1, %c1_8, %c0_9], %8 {strides = array<i32>} : memref<10x18x4xf32, #tpu.memory_space<vmem>>, vector<8x16x4xf32>,
    %c0_i32 = arith.constant 0 : i32
    %10 = arith.addi %1, %c0_i32 : i32
    %c0_i32_10 = arith.constant 0 : i32
    %11 = arith.cmpi sge, %10, %c0_i32_10 : i32
    %c16_i32 = arith.constant 16 : i32
    %12 = arith.cmpi slt, %10, %c16_i32 : i32
    %13 = arith.andi %11, %12 : i1
    %c0_i32_11 = arith.constant 0 : i32
    %c15_i32 = arith.constant 15 : i32
    %14 = arith.maxsi %c0_i32_11, %10 : i32
    %15 = arith.minsi %c15_i32, %14 : i32
    %c0_12 = arith.constant 0 : index
    %16 = arith.index_cast %15 : i32 to index
    %c0_13 = arith.constant 0 : index
    %c0_14 = arith.constant 0 : index
    %17 = vector.load %arg2[%c0_12, %16, %c0_13, %c0_14] : memref<1x16x16x4xf32, #tpu.memory_space<vmem>>, vector<1x1x16x4xf32>
    %18 = vector.shape_cast %17 : vector<1x1x16x4xf32> to vector<1x16x4xf32>
    %cst_15 = arith.constant 0.000000e+00 : f32
    %19 = vector.broadcast %cst_15 : f32 to vector<1x16x4xf32>
    %20 = arith.select %13, %18, %19 : vector<1x16x4xf32>
    %c0_16 = arith.constant 0 : index
    %c1_17 = arith.constant 1 : index
    %c0_18 = arith.constant 0 : index
    %21 = vector.load %arg6[%c0_16, %c1_17, %c0_18] : memref<10x18x4xf32, #tpu.memory_space<vmem>>, vector<1x16x4xf32>
    tpu.vector_store %arg6[%c0_16, %c1_17, %c0_18], %20 {strides = array<i32>} : memref<10x18x4xf32, #tpu.memory_space<vmem>>, vector<1x16x4xf32>,
    %c9_i32 = arith.constant 9 : i32
    %22 = arith.addi %1, %c9_i32 : i32
    %c0_i32_19 = arith.constant 0 : i32
    %23 = arith.cmpi sge, %22, %c0_i32_19 : i32
    %c16_i32_20 = arith.constant 16 : i32
    %24 = arith.cmpi slt, %22, %c16_i32_20 : i32
    %25 = arith.andi %23, %24 : i1
    %c0_i32_21 = arith.constant 0 : i32
    %c15_i32_22 = arith.constant 15 : i32
    %26 = arith.maxsi %c0_i32_21, %22 : i32
    %27 = arith.minsi %c15_i32_22, %26 : i32
    %c0_23 = arith.constant 0 : index
    %28 = arith.index_cast %27 : i32 to index
    %c0_24 = arith.constant 0 : index
    %c0_25 = arith.constant 0 : index
    %29 = vector.load %arg2[%c0_23, %28, %c0_24, %c0_25] : memref<1x16x16x4xf32, #tpu.memory_space<vmem>>, vector<1x1x16x4xf32>
    %30 = vector.shape_cast %29 : vector<1x1x16x4xf32> to vector<1x16x4xf32>
    %cst_26 = arith.constant 0.000000e+00 : f32
    %31 = vector.broadcast %cst_26 : f32 to vector<1x16x4xf32>
    %32 = arith.select %25, %30, %31 : vector<1x16x4xf32>
    %c9 = arith.constant 9 : index
    %c1_27 = arith.constant 1 : index
    %c0_28 = arith.constant 0 : index
    %33 = vector.load %arg6[%c9, %c1_27, %c0_28] : memref<10x18x4xf32, #tpu.memory_space<vmem>>, vector<1x16x4xf32>
    tpu.vector_store %arg6[%c9, %c1_27, %c0_28], %32 {strides = array<i32>} : memref<10x18x4xf32, #tpu.memory_space<vmem>>, vector<1x16x4xf32>,
    %c0_29 = arith.constant 0 : index
    %c0_30 = arith.constant 0 : index
    %c0_31 = arith.constant 0 : index
    %34 = vector.load %arg6[%c0_29, %c0_30, %c0_31] : memref<10x18x4xf32, #tpu.memory_space<vmem>>, vector<8x16x4xf32>
    %c0_32 = arith.constant 0 : index
    %c1_33 = arith.constant 1 : index
    %c0_34 = arith.constant 0 : index
    %35 = vector.load %arg6[%c0_32, %c1_33, %c0_34] : memref<10x18x4xf32, #tpu.memory_space<vmem>>, vector<8x16x4xf32>
    %c0_35 = arith.constant 0 : index
    %c2 = arith.constant 2 : index
    %c0_36 = arith.constant 0 : index
    %36 = vector.load %arg6[%c0_35, %c2, %c0_36] : memref<10x18x4xf32, #tpu.memory_space<vmem>>, vector<8x16x4xf32>
    %c1_37 = arith.constant 1 : index
    %c0_38 = arith.constant 0 : index
    %c0_39 = arith.constant 0 : index
    %37 = vector.load %arg6[%c1_37, %c0_38, %c0_39] : memref<10x18x4xf32, #tpu.memory_space<vmem>>, vector<8x16x4xf32>
    %c1_40 = arith.constant 1 : index
    %c1_41 = arith.constant 1 : index
    %c0_42 = arith.constant 0 : index
    %38 = vector.load %arg6[%c1_40, %c1_41, %c0_42] : memref<10x18x4xf32, #tpu.memory_space<vmem>>, vector<8x16x4xf32>
    %c1_43 = arith.constant 1 : index
    %c2_44 = arith.constant 2 : index
    %c0_45 = arith.constant 0 : index
    %39 = vector.load %arg6[%c1_43, %c2_44, %c0_45] : memref<10x18x4xf32, #tpu.memory_space<vmem>>, vector<8x16x4xf32>
    %c2_46 = arith.constant 2 : index
    %c0_47 = arith.constant 0 : index
    %c0_48 = arith.constant 0 : index
    %40 = vector.load %arg6[%c2_46, %c0_47, %c0_48] : memref<10x18x4xf32, #tpu.memory_space<vmem>>, vector<8x16x4xf32>
    %c2_49 = arith.constant 2 : index
    %c1_50 = arith.constant 1 : index
    %c0_51 = arith.constant 0 : index
    %41 = vector.load %arg6[%c2_49, %c1_50, %c0_51] : memref<10x18x4xf32, #tpu.memory_space<vmem>>, vector<8x16x4xf32>
    %c2_52 = arith.constant 2 : index
    %c2_53 = arith.constant 2 : index
    %c0_54 = arith.constant 0 : index
    %42 = vector.load %arg6[%c2_52, %c2_53, %c0_54] : memref<10x18x4xf32, #tpu.memory_space<vmem>>, vector<8x16x4xf32>
    %43 = tpu.concatenate %34, %35, %36, %37, %38, %39, %40, %41, %42 in 2 : vector<8x16x4xf32>, vector<8x16x4xf32>, vector<8x16x4xf32>, vector<8x16x4xf32>, vector<8x16x4xf32>, vector<8x16x4xf32>, vector<8x16x4xf32>, vector<8x16x4xf32>, vector<8x16x4xf32> -> vector<8x16x36xf32>
    %44 = vector.shape_cast %43 : vector<8x16x36xf32> to vector<128x36xf32>
    %c0_55 = arith.constant 0 : index
    %c0_56 = arith.constant 0 : index
    %c0_57 = arith.constant 0 : index
    %45 = vector.load %arg3[%c0_55, %c0_56, %c0_57] : memref<1x8x36xf32, #tpu.memory_space<vmem>>, vector<1x8x36xf32>
    %46 = vector.shape_cast %45 : vector<1x8x36xf32> to vector<8x36xf32>
    %cst_58 = arith.constant dense<0.000000e+00> : vector<8x128xf32>
    %47 = tpu.matmul %46, %44, %cst_58 {dimension_numbers = #tpu.dot_dimension_numbers<[1], [1], [0], [0], [0, 0, 1, 0], [], []>} : vector<8x36xf32>, vector<128x36xf32>, vector<8x128xf32> -> vector<8x128xf32>
    %c0_59 = arith.constant 0 : index
    %c0_60 = arith.constant 0 : index
    %c0_61 = arith.constant 0 : index
    %48 = vector.load %arg4[%c0_59, %c0_60, %c0_61] : memref<1x8x1xf32, #tpu.memory_space<vmem>>, vector<1x8x1xf32>
    %49 = vector.shape_cast %48 : vector<1x8x1xf32> to vector<8x1xf32>
    %50 = vector.broadcast %49 : vector<8x1xf32> to vector<8x128xf32>
    %51 = arith.addf %47, %50 : vector<8x128xf32>
    %cst_62 = arith.constant 0.000000e+00 : f32
    %52 = vector.broadcast %cst_62 : f32 to vector<8x128xf32>
    %53 = arith.maximumf %51, %52 : vector<8x128xf32>
    %c0_63 = arith.constant 0 : index
    %c0_64 = arith.constant 0 : index
    %c0_65 = arith.constant 0 : index
    %54 = vector.load %arg5[%c0_63, %c0_64, %c0_65] : memref<1x8x128xf32, #tpu.memory_space<vmem>>, vector<1x8x128xf32>
    %55 = vector.shape_cast %54 : vector<1x8x128xf32> to vector<8x128xf32>
    %56 = vector.shape_cast %53 : vector<8x128xf32> to vector<1x8x128xf32>
    tpu.vector_store %arg5[%c0_63, %c0_64, %c0_65], %56 {strides = array<i32>} : memref<1x8x128xf32, #tpu.memory_space<vmem>>, vector<1x8x128xf32>,
    return
  }
  func.func @transform_0(%arg0: i32, %arg1: i32) -> (i32, i32, i32, i32) {
    %c0_i32 = arith.constant 0 : i32
    %c0_i32_0 = arith.constant 0 : i32
    %c0_i32_1 = arith.constant 0 : i32
    %c0_i32_2 = arith.constant 0 : i32
    return %arg0, %c0_i32, %c0_i32_0, %c0_i32_1 : i32, i32, i32, i32
  }
  func.func @transform_1(%arg0: i32, %arg1: i32) -> (i32, i32, i32) {
    %c0_i32 = arith.constant 0 : i32
    %c0_i32_0 = arith.constant 0 : i32
    %c0_i32_1 = arith.constant 0 : i32
    %c0_i32_2 = arith.constant 0 : i32
    return %c0_i32, %c0_i32_0, %c0_i32_1 : i32, i32, i32
  }
  func.func @transform_2(%arg0: i32, %arg1: i32) -> (i32, i32, i32) {
    %c0_i32 = arith.constant 0 : i32
    %c0_i32_0 = arith.constant 0 : i32
    %c0_i32_1 = arith.constant 0 : i32
    %c0_i32_2 = arith.constant 0 : i32
    return %c0_i32, %c0_i32_0, %c0_i32_1 : i32, i32, i32
  }
  func.func @transform_3(%arg0: i32, %arg1: i32) -> (i32, i32, i32) {
    %c0_i32 = arith.constant 0 : i32
    %c0_i32_0 = arith.constant 0 : i32
    return %arg0, %c0_i32, %arg1 : i32, i32, i32
  }
}

</mosaic_0001>

<llo_original>
// kernel: tpu_custom_call.1
$region0: #{tpu_custom_call.1}
  #allocation0 [shape = 'u32[]', space=smem, size = 0x4, offset = 0x4, fixed_abs, tag = 'smem constant byte address 0x4 - core index']
  #allocation1 [shape = 'u32[144,128]{1,0:T(1,128)}', space=vmem, size = 0x12000, scoped, tag = 'internal scratch']
  #allocation2 [shape = 'f32[10,18,4]{2,1,0:T(8,128)}', space=vmem, size = 0x1e000, scoped, tag = 'scratch operand']
  %s0 = inlined_call_operand.vmem [shape: f32[2,16,16,4], index: 0, kind: input, shape index: {}]
  %s1 = inlined_call_operand.vmem [shape: f32[1,8,36], index: 1, kind: input, shape index: {}]
  %s2 = inlined_call_operand.vmem [shape: f32[1,8,1], index: 2, kind: input, shape index: {}]
  %s3 = inlined_call_operand.hbm [shape: f32[2,8,256], index: 3, kind: output, shape index: {}]
  %s4 = sld [smem:[#allocation0]]
  $region45: #{tpu_custom_call.1} parent=0
    _
  %s6 = ssub.s32 1, %s4
  %s7 = scalar_select 0, %s6, %s4
  $region1: #{tpu_custom_call.1} parent=0
    #allocation3 [shape = 'u8[8192]{0}', space=vmem, size = 0x2000, scoped, tag = 'output window, operand 0']
    #allocation4 [shape = 's32[2]{0}', space=sflag, size = 0x8, scoped, tag = 'scoped memory for tpu_custom_call.1']
    %8 = vsyncpa [#allocation4], 0
    %s9 = scalar_lea.sflag [#allocation4], 1
    %10 = vsyncpa %s9, 0
    loop: start=0, step=1, limit=6
    $region2: #{tpu_custom_call.1} parent=1 // loop_pre_header
      _
    $region3: #{tpu_custom_call.1} parent=1 // loop_header
      %s12 = sphi 0, %s16
      %p13 = scmp.ge.s32.totalorder %s12, 6
      %s19 = sphi 0, %s31
      %s20 = sphi 0, %s27
      %s21 = sphi 0, %s19
      %s22 = sphi 0, %s20
      %s23 = sphi 0, %s21
      %s24 = sphi 0, %s22
      %s34 = sphi 0, %s36
      %s37 = sphi 0, %s34
      %s38 = sphi 0, %s37
      %s54 = sphi 0, %s38
      %s58 = sphi 0, %s58
      %s60 = sphi 0, %s58
      %s61 = sphi 0, %s60
      %s75 = sphi 0, %s61
      %s79 = sphi 0, %s79
      %s81 = sphi 0, %s79
      %s82 = sphi 0, %s81
      %s96 = sphi 0, %s82
      %s104 = sphi 0, %s106
      %s107 = sphi 0, %s104
      %s108 = sphi 0, %s107
      %s124 = sphi 0, %s108
    $region4: #{tpu_custom_call.1} parent=1 // loop_header_branch
      %15 = sbr.rel (%p13) target = $region8
    $region5: #{tpu_custom_call.1} parent=1 // loop_body
      %s17 = ssub.s32 %s12, 1
      %s18 = ssub.s32 %s12, 2
      %s25 = sadd.s32 1, %s20
      %p26 = scmp.ge.s32.totalorder %s25, 2
      %s27 = scalar_select %p26, 0, %s25
      %s28 = sadd.s32 1, %s19
      %s29 = scalar_select %p26, %s28, %s19
      %p30 = scmp.ge.s32.totalorder %s29, 2
      %s31 = scalar_select %p30, 0, %s29
      %s32 = ssub.s32 %s19, %s31
      %p33 = scmp.eq.s32.totalorder %s32, 0
      %s35 = sadd.s32 %s34, 1
      %s36 = scalar_select %p33, %s34, %s35
      %p39 = pneg %p33
      %p40 = scmp.eq.s32.totalorder %s12, 3
      %p41 = por %p39, %p40
      %p42 = scmp.ne.s32.totalorder %s34, %s37
      %p43 = scmp.eq.s32.totalorder %s12, 0
      %p44 = por %p42, %p43
      %p45 = scmp.ne.s32.totalorder %s34, %s37
      %p46 = scmp.eq.s32.totalorder %s17, 3
      %p47 = por %p45, %p46
      %p48 = scmp.ne.s32.totalorder %s37, %s38
      %p49 = scmp.eq.s32.totalorder %s17, 0
      %p50 = por %p48, %p49
      %p51 = scmp.ne.s32.totalorder %s37, %s38
      %p52 = scmp.eq.s32.totalorder %s18, 3
      %p53 = por %p51, %p52
      %p55 = scmp.ne.s32.totalorder %s38, %s54
      %p56 = scmp.eq.s32.totalorder %s18, 0
      %p57 = por %p55, %p56
      %s59 = sadd.s32 %s58, 1
      %p62 = scmp.eq.s32.totalorder %s12, 3
      %p63 = scmp.ne.s32.totalorder %s58, %s60
      %p64 = scmp.eq.s32.totalorder %s12, 0
      %p65 = por %p63, %p64
      %p66 = scmp.ne.s32.totalorder %s58, %s60
      %p67 = scmp.eq.s32.totalorder %s17, 3
      %p68 = por %p66, %p67
      %p69 = scmp.ne.s32.totalorder %s60, %s61
      %p70 = scmp.eq.s32.totalorder %s17, 0
      %p71 = por %p69, %p70
      %p72 = scmp.ne.s32.totalorder %s60, %s61
      %p73 = scmp.eq.s32.totalorder %s18, 3
      %p74 = por %p72, %p73
      %p76 = scmp.ne.s32.totalorder %s61, %s75
      %p77 = scmp.eq.s32.totalorder %s18, 0
      %p78 = por %p76, %p77
      %s80 = sadd.s32 %s79, 1
      %p83 = scmp.eq.s32.totalorder %s12, 3
      %p84 = scmp.ne.s32.totalorder %s79, %s81
      %p85 = scmp.eq.s32.totalorder %s12, 0
      %p86 = por %p84, %p85
      %p87 = scmp.ne.s32.totalorder %s79, %s81
      %p88 = scmp.eq.s32.totalorder %s17, 3
      %p89 = por %p87, %p88
      %p90 = scmp.ne.s32.totalorder %s81, %s82
      %p91 = scmp.eq.s32.totalorder %s17, 0
      %p92 = por %p90, %p91
      %p93 = scmp.ne.s32.totalorder %s81, %s82
      %p94 = scmp.eq.s32.totalorder %s18, 3
      %p95 = por %p93, %p94
      %p97 = scmp.ne.s32.totalorder %s82, %s96
      %p98 = scmp.eq.s32.totalorder %s18, 0
      %p99 = por %p97, %p98
      %s100 = ssub.s32 %s19, %s31
      %s101 = ssub.s32 %s20, %s27
      %s102 = sor.u32 %s100, %s101
      %p103 = scmp.eq.s32.totalorder %s102, 0
      %s105 = sadd.s32 %s104, 1
      %s106 = scalar_select %p103, %s104, %s105
      %p109 = pneg %p103
      %p110 = scmp.eq.s32.totalorder %s12, 3
      %p111 = por %p109, %p110
      %p112 = scmp.ne.s32.totalorder %s104, %s107
      %p113 = scmp.eq.s32.totalorder %s12, 0
      %p114 = por %p112, %p113
      %p115 = scmp.ne.s32.totalorder %s104, %s107
      %p116 = scmp.eq.s32.totalorder %s17, 3
      %p117 = por %p115, %p116
      %p118 = scmp.ne.s32.totalorder %s107, %s108
      %p119 = scmp.eq.s32.totalorder %s17, 0
      %p120 = por %p118, %p119
      %p121 = scmp.ne.s32.totalorder %s107, %s108
      %p122 = scmp.eq.s32.totalorder %s18, 3
      %p123 = por %p121, %p122
      %p125 = scmp.ne.s32.totalorder %s108, %s124
      %p126 = scmp.eq.s32.totalorder %s18, 0
      %p127 = por %p125, %p126
      %p128 = scmp.le.s32.totalorder 1, %s12
      %p129 = scmp.lt.s32.totalorder %s12, 5
      %p130 = pnand %p128, %p129
      %p131 = pneg %p130
      // Predicated region
      $region9: #{tpu_custom_call.1} parent=5 // pred_check
        _
      $region10: #{tpu_custom_call.1} parent=5 // pred_check_branch
        %133 = sbr.rel (%p130) target = $region12
      $region11: #{tpu_custom_call.1} parent=5 // pred_region
        %s134 = ssub.s32 %s12, 1
        // Predicated region
        $region13: #{tpu_custom_call.1} parent=11 // pred_check
          %p135 = pneg %p71
        $region14: #{tpu_custom_call.1} parent=11 // pred_check_branch
          %137 = sbr.rel (%p135) target = $region16
        $region15: #{tpu_custom_call.1} parent=11 // pred_region
          _
        $region16: #{tpu_custom_call.1} parent=11 // pred_fallthru
          _
        // Predicated region
        $region17: #{tpu_custom_call.1} parent=11 // pred_check
          %p138 = pneg %p92
        $region18: #{tpu_custom_call.1} parent=11 // pred_check_branch
          %140 = sbr.rel (%p138) target = $region20
        $region19: #{tpu_custom_call.1} parent=11 // pred_region
          _
        $region20: #{tpu_custom_call.1} parent=11 // pred_fallthru
          _
      $region12: #{tpu_custom_call.1} parent=5 // pred_fallthru
        _
      %p141 = scmp.lt.s32.totalorder %s12, 4
      // Predicated region
      $region21: #{tpu_custom_call.1} parent=5 // pred_check
        %p142 = pneg %p141
      $region22: #{tpu_custom_call.1} parent=5 // pred_check_branch
        %144 = sbr.rel (%p142) target = $region24
      $region23: #{tpu_custom_call.1} parent=5 // pred_region
        // Predicated region
        $region25: #{tpu_custom_call.1} parent=23 // pred_check
          %p145 = pneg %p44
        $region26: #{tpu_custom_call.1} parent=23 // pred_check_branch
          %147 = sbr.rel (%p145) target = $region28
        $region27: #{tpu_custom_call.1} parent=23 // pred_region
          %p148 = scmp.lt.s32.totalorder %s19, 1
          %s149 = scalar_select %p148, %s19, 1
          %s150 = smul.addr %s149, 32
          %s151 = smul.addr %s150, 8
          %s152 = scalar_lea.vmem %s0, %s151
        $region28: #{tpu_custom_call.1} parent=23 // pred_fallthru
          _
      $region24: #{tpu_custom_call.1} parent=5 // pred_fallthru
        _
      %p153 = scmp.le.s32.totalorder 1, %s12
      %p154 = scmp.lt.s32.totalorder %s12, 5
      %p155 = pnand %p153, %p154
      %p156 = pneg %p155
      // Predicated region
      $region29: #{tpu_custom_call.1} parent=5 // pred_check
        _
      $region30: #{tpu_custom_call.1} parent=5 // pred_check_branch
        %158 = sbr.rel (%p155) target = $region32
      $region31: #{tpu_custom_call.1} parent=5 // pred_region
        %s159 = ssub.s32 %s12, 1
        %p160 = scmp.lt.s32.totalorder %s21, 1
        %s161 = scalar_select %p160, %s21, 1
        %s162 = smul.addr %s161, 32
        %s163 = smul.addr %s162, 8
        %s164 = scalar_lea.vmem %s0, %s163
        %p165 = pneg %p50
        %p166 = pneg %p47
        %p167 = pneg %p71
        %p168 = pneg %p68
        %p169 = pneg %p92
        %p170 = pneg %p89
        %p171 = pneg %p120
        %p172 = pneg %p117
        %s173 = sand.u32 %s107, 1
        %s174 = scalar_lea.sflag [#allocation4], %s173
        %s175 = sand.u32 %s107, 1
        %s176 = smul.addr %s175, 8
        %s177 = scalar_lea.vmem [#allocation3], %s176
        %p178 = scmp.lt.s32.totalorder %s21, 1
        %s179 = scalar_select %p178, %s21, 1
        %s180 = smul.addr %s179, 32
        %s181 = smul.addr %s180, 8
        %s182 = scalar_lea.vmem %s0, %s181
        %s183 = smul.u32 %s22, 8
        %s184 = ssub.s32 %s183, 1
        %vm185 = vcmask 24576
        %186 = vst.msk [vmem:[#allocation2] sm:$0x1] %vm185, 0.0
        %187 = vst.msk [vmem:[#allocation2 + $0x18] sm:$0x1] %vm185, 0.0
        %188 = vst.msk [vmem:[#allocation2 + $0x30] sm:$0x1] %vm185, 0.0
        %189 = vst.msk [vmem:[#allocation2 + $0x48] sm:$0x1] %vm185, 0.0
        %190 = vst.msk [vmem:[#allocation2 + $0x60] sm:$0x1] %vm185, 0.0
        %191 = vst.msk [vmem:[#allocation2 + $0x78] sm:$0x1] %vm185, 0.0
        %192 = vst.msk [vmem:[#allocation2 + $0x90] sm:$0x1] %vm185, 0.0
        %193 = vst.msk [vmem:[#allocation2 + $0xa8] sm:$0x1] %vm185, 0.0
        %194 = vst.msk [vmem:[#allocation2 + $0xc0] sm:$0x1] %vm185, 0.0
        %195 = vst.msk [vmem:[#allocation2 + $0xd8] sm:$0x1] %vm185, 0.0
        %196 = vst.msk [vmem:[#allocation2 + $0x11] sm:$0x1] %vm185, 0.0
        %197 = vst.msk [vmem:[#allocation2 + $0x29] sm:$0x1] %vm185, 0.0
        %198 = vst.msk [vmem:[#allocation2 + $0x41] sm:$0x1] %vm185, 0.0
        %199 = vst.msk [vmem:[#allocation2 + $0x59] sm:$0x1] %vm185, 0.0
        %200 = vst.msk [vmem:[#allocation2 + $0x71] sm:$0x1] %vm185, 0.0
        %201 = vst.msk [vmem:[#allocation2 + $0x89] sm:$0x1] %vm185, 0.0
        %202 = vst.msk [vmem:[#allocation2 + $0xa1] sm:$0x1] %vm185, 0.0
        %203 = vst.msk [vmem:[#allocation2 + $0xb9] sm:$0x1] %vm185, 0.0
        %204 = vst.msk [vmem:[#allocation2 + $0xd1] sm:$0x1] %vm185, 0.0
        %205 = vst.msk [vmem:[#allocation2 + $0xe9] sm:$0x1] %vm185, 0.0
        %s206 = smul.u32 %s183, 16
        %s207 = scalar_lea.vmem %s182, %s206
        %v208 = vld [vmem:[%s207] sm:$0xff]
        %v209 = vld [vmem:[%s207 + $0x8] sm:$0xff]
        %v210 = vld [vmem:[%s207 + $0x10] sm:$0xff]
        %v211 = vld [vmem:[%s207 + $0x18] sm:$0xff]
        %v212 = vld [vmem:[%s207 + $0x20] sm:$0xff]
        %v213 = vld [vmem:[%s207 + $0x28] sm:$0xff]
        %v214 = vld [vmem:[%s207 + $0x30] sm:$0xff]
        %v215 = vld [vmem:[%s207 + $0x38] sm:$0xff]
        %v216 = vld [vmem:[%s207 + $0x40] sm:$0xff]
        %v217 = vld [vmem:[%s207 + $0x48] sm:$0xff]
        %v218 = vld [vmem:[%s207 + $0x50] sm:$0xff]
        %v219 = vld [vmem:[%s207 + $0x58] sm:$0xff]
        %v220 = vld [vmem:[%s207 + $0x60] sm:$0xff]
        %v221 = vld [vmem:[%s207 + $0x68] sm:$0xff]
        %v222 = vld [vmem:[%s207 + $0x70] sm:$0xff]
        %v223 = vld [vmem:[%s207 + $0x78] sm:$0xff]
        %s224 = scalar_lea.vmem [#allocation2], 24
        %vm225 = vcmask 31744
        %226 = vst.msk [vmem:[%s224 + $0x1] sm:$0xff] %vm225, %v208
        %227 = vst.msk [vmem:[%s224 + $0x9] sm:$0xff] %vm225, %v209
        %228 = vst.msk [vmem:[%s224 + $0x19] sm:$0xff] %vm225, %v210
        %229 = vst.msk [vmem:[%s224 + $0x21] sm:$0xff] %vm225, %v211
        %230 = vst.msk [vmem:[%s224 + $0x31] sm:$0xff] %vm225, %v212
        %231 = vst.msk [vmem:[%s224 + $0x39] sm:$0xff] %vm225, %v213
        %232 = vst.msk [vmem:[%s224 + $0x49] sm:$0xff] %vm225, %v214
        %233 = vst.msk [vmem:[%s224 + $0x51] sm:$0xff] %vm225, %v215
        %234 = vst.msk [vmem:[%s224 + $0x61] sm:$0xff] %vm225, %v216
        %235 = vst.msk [vmem:[%s224 + $0x69] sm:$0xff] %vm225, %v217
        %236 = vst.msk [vmem:[%s224 + $0x79] sm:$0xff] %vm225, %v218
        %237 = vst.msk [vmem:[%s224 + $0x81] sm:$0xff] %vm225, %v219
        %238 = vst.msk [vmem:[%s224 + $0x91] sm:$0xff] %vm225, %v220
        %239 = vst.msk [vmem:[%s224 + $0x99] sm:$0xff] %vm225, %v221
        %240 = vst.msk [vmem:[%s224 + $0xa9] sm:$0xff] %vm225, %v222
        %241 = vst.msk [vmem:[%s224 + $0xb1] sm:$0xff] %vm225, %v223
        %p242 = scmp.ge.s32.totalorder %s184, 0
        %p243 = scmp.lt.s32.totalorder %s184, 16
        %p244 = pnand %p242, %p243
        %p245 = pneg %p244
        %p246 = scmp.gt.s32.totalorder %s184, 0
        %s247 = scalar_select %p246, %s184, 0
        %p248 = scmp.lt.s32.totalorder %s247, 15
        %s249 = scalar_select %p248, %s247, 15
        %s250 = smul.u32 %s249, 16
        %s251 = scalar_lea.vmem %s182, %s250
        %v252 = vld [vmem:[%s251] sm:$0xff]
        %v253 = vld [vmem:[%s251 + $0x8] sm:$0xff]
        %s254 = scalar_select %p245, 1, 0
        %v255 = vstv %s254
        %vm256 = vcmp.eq.s32.totalorder %v255, 1
        %v257 = vsel %vm256, %v252, 0.0
        %v258 = vsel %vm256, %v253, 0.0
        %259 = vst.msk [vmem:[#allocation2 + $0x1] sm:$0xff] %vm225, %v257
        %260 = vst.msk [vmem:[#allocation2 + $0x9] sm:$0xff] %vm225, %v258
        %s261 = sadd.s32 %s183, 8
        %p262 = scmp.ge.s32.totalorder %s261, 0
        %p263 = scmp.lt.s32.totalorder %s261, 16
        %p264 = pnand %p262, %p263
        %p265 = pneg %p264
        %p266 = scmp.gt.s32.totalorder %s261, 0
        %s267 = scalar_select %p266, %s261, 0
        %p268 = scmp.lt.s32.totalorder %s267, 15
        %s269 = scalar_select %p268, %s267, 15
        %s270 = smul.u32 %s269, 16
        %s271 = scalar_lea.vmem %s182, %s270
        %v272 = vld [vmem:[%s271] sm:$0xff]
        %v273 = vld [vmem:[%s271 + $0x8] sm:$0xff]
        %s274 = scalar_select %p265, 1, 0
        %v275 = vstv %s274
        %vm276 = vcmp.eq.s32.totalorder %v275, 1
        %v277 = vsel %vm276, %v272, 0.0
        %v278 = vsel %vm276, %v273, 0.0
        %s279 = scalar_lea.vmem [#allocation2], 216
        %280 = vst.msk [vmem:[%s279 + $0x1] sm:$0xff] %vm225, %v277
        %281 = vst.msk [vmem:[%s279 + $0x9] sm:$0xff] %vm225, %v278
        %v282 = vld [vmem:[#allocation2] sm:$0xff]
        %v283 = vld [vmem:[#allocation2 + $0x8] sm:$0xff]
        %v284 = vld [vmem:[#allocation2 + $0x18] sm:$0xff]
        %v285 = vld [vmem:[#allocation2 + $0x20] sm:$0xff]
        %v286 = vld [vmem:[#allocation2 + $0x30] sm:$0xff]
        %v287 = vld [vmem:[#allocation2 + $0x38] sm:$0xff]
        %v288 = vld [vmem:[#allocation2 + $0x48] sm:$0xff]
        %v289 = vld [vmem:[#allocation2 + $0x50] sm:$0xff]
        %v290 = vld [vmem:[#allocation2 + $0x60] sm:$0xff]
        %v291 = vld [vmem:[#allocation2 + $0x68] sm:$0xff]
        %v292 = vld [vmem:[#allocation2 + $0x78] sm:$0xff]
        %v293 = vld [vmem:[#allocation2 + $0x80] sm:$0xff]
        %v294 = vld [vmem:[#allocation2 + $0x90] sm:$0xff]
        %v295 = vld [vmem:[#allocation2 + $0x98] sm:$0xff]
        %v296 = vld [vmem:[#allocation2 + $0xa8] sm:$0xff]
        %v297 = vld [vmem:[#allocation2 + $0xb0] sm:$0xff]
        %v298 = vld [vmem:[#allocation2 + $0x1] sm:$0xff]
        %v299 = vld [vmem:[#allocation2 + $0x9] sm:$0xff]
        %v300 = vld [vmem:[#allocation2 + $0x19] sm:$0xff]
        %v301 = vld [vmem:[#allocation2 + $0x21] sm:$0xff]
        %v302 = vld [vmem:[#allocation2 + $0x31] sm:$0xff]
        %v303 = vld [vmem:[#allocation2 + $0x39] sm:$0xff]
        %v304 = vld [vmem:[#allocation2 + $0x49] sm:$0xff]
        %v305 = vld [vmem:[#allocation2 + $0x51] sm:$0xff]
        %v306 = vld [vmem:[#allocation2 + $0x61] sm:$0xff]
        %v307 = vld [vmem:[#allocation2 + $0x69] sm:$0xff]
        %v308 = vld [vmem:[#allocation2 + $0x79] sm:$0xff]
        %v309 = vld [vmem:[#allocation2 + $0x81] sm:$0xff]
        %v310 = vld [vmem:[#allocation2 + $0x91] sm:$0xff]
        %v311 = vld [vmem:[#allocation2 + $0x99] sm:$0xff]
        %v312 = vld [vmem:[#allocation2 + $0xa9] sm:$0xff]
        %v313 = vld [vmem:[#allocation2 + $0xb1] sm:$0xff]
        %v314 = vld [vmem:[#allocation2 + $0x2] sm:$0xff]
        %v315 = vld [vmem:[#allocation2 + $0xa] sm:$0xff]
        %v316 = vld [vmem:[#allocation2 + $0x1a] sm:$0xff]
        %v317 = vld [vmem:[#allocation2 + $0x22] sm:$0xff]
        %v318 = vld [vmem:[#allocation2 + $0x32] sm:$0xff]
        %v319 = vld [vmem:[#allocation2 + $0x3a] sm:$0xff]
        %v320 = vld [vmem:[#allocation2 + $0x4a] sm:$0xff]
        %v321 = vld [vmem:[#allocation2 + $0x52] sm:$0xff]
        %v322 = vld [vmem:[#allocation2 + $0x62] sm:$0xff]
        %v323 = vld [vmem:[#allocation2 + $0x6a] sm:$0xff]
        %v324 = vld [vmem:[#allocation2 + $0x7a] sm:$0xff]
        %v325 = vld [vmem:[#allocation2 + $0x82] sm:$0xff]
        %v326 = vld [vmem:[#allocation2 + $0x92] sm:$0xff]
        %v327 = vld [vmem:[#allocation2 + $0x9a] sm:$0xff]
        %v328 = vld [vmem:[#allocation2 + $0xaa] sm:$0xff]
        %v329 = vld [vmem:[#allocation2 + $0xb2] sm:$0xff]
        %v330 = vld [vmem:[%s224] sm:$0xff]
        %v331 = vld [vmem:[%s224 + $0x8] sm:$0xff]
        %v332 = vld [vmem:[%s224 + $0x18] sm:$0xff]
        %v333 = vld [vmem:[%s224 + $0x20] sm:$0xff]
        %v334 = vld [vmem:[%s224 + $0x30] sm:$0xff]
        %v335 = vld [vmem:[%s224 + $0x38] sm:$0xff]
        %v336 = vld [vmem:[%s224 + $0x48] sm:$0xff]
        %v337 = vld [vmem:[%s224 + $0x50] sm:$0xff]
        %v338 = vld [vmem:[%s224 + $0x60] sm:$0xff]
        %v339 = vld [vmem:[%s224 + $0x68] sm:$0xff]
        %v340 = vld [vmem:[%s224 + $0x78] sm:$0xff]
        %v341 = vld [vmem:[%s224 + $0x80] sm:$0xff]
        %v342 = vld [vmem:[%s224 + $0x90] sm:$0xff]
        %v343 = vld [vmem:[%s224 + $0x98] sm:$0xff]
        %v344 = vld [vmem:[%s224 + $0xa8] sm:$0xff]
        %v345 = vld [vmem:[%s224 + $0xb0] sm:$0xff]
        %v346 = vld [vmem:[%s224 + $0x1] sm:$0xff]
        %v347 = vld [vmem:[%s224 + $0x9] sm:$0xff]
        %v348 = vld [vmem:[%s224 + $0x19] sm:$0xff]
        %v349 = vld [vmem:[%s224 + $0x21] sm:$0xff]
        %v350 = vld [vmem:[%s224 + $0x31] sm:$0xff]
        %v351 = vld [vmem:[%s224 + $0x39] sm:$0xff]
        %v352 = vld [vmem:[%s224 + $0x49] sm:$0xff]
        %v353 = vld [vmem:[%s224 + $0x51] sm:$0xff]
        %v354 = vld [vmem:[%s224 + $0x61] sm:$0xff]
        %v355 = vld [vmem:[%s224 + $0x69] sm:$0xff]
        %v356 = vld [vmem:[%s224 + $0x79] sm:$0xff]
        %v357 = vld [vmem:[%s224 + $0x81] sm:$0xff]
        %v358 = vld [vmem:[%s224 + $0x91] sm:$0xff]
        %v359 = vld [vmem:[%s224 + $0x99] sm:$0xff]
        %v360 = vld [vmem:[%s224 + $0xa9] sm:$0xff]
        %v361 = vld [vmem:[%s224 + $0xb1] sm:$0xff]
        %v362 = vld [vmem:[%s224 + $0x2] sm:$0xff]
        %v363 = vld [vmem:[%s224 + $0xa] sm:$0xff]
        %v364 = vld [vmem:[%s224 + $0x1a] sm:$0xff]
        %v365 = vld [vmem:[%s224 + $0x22] sm:$0xff]
        %v366 = vld [vmem:[%s224 + $0x32] sm:$0xff]
        %v367 = vld [vmem:[%s224 + $0x3a] sm:$0xff]
        %v368 = vld [vmem:[%s224 + $0x4a] sm:$0xff]
        %v369 = vld [vmem:[%s224 + $0x52] sm:$0xff]
        %v370 = vld [vmem:[%s224 + $0x62] sm:$0xff]
        %v371 = vld [vmem:[%s224 + $0x6a] sm:$0xff]
        %v372 = vld [vmem:[%s224 + $0x7a] sm:$0xff]
        %v373 = vld [vmem:[%s224 + $0x82] sm:$0xff]
        %v374 = vld [vmem:[%s224 + $0x92] sm:$0xff]
        %v375 = vld [vmem:[%s224 + $0x9a] sm:$0xff]
        %v376 = vld [vmem:[%s224 + $0xaa] sm:$0xff]
        %v377 = vld [vmem:[%s224 + $0xb2] sm:$0xff]
        %s378 = scalar_lea.vmem [#allocation2], 48
        %v379 = vld [vmem:[%s378] sm:$0xff]
        %v380 = vld [vmem:[%s378 + $0x8] sm:$0xff]
        %v381 = vld [vmem:[%s378 + $0x18] sm:$0xff]
        %v382 = vld [vmem:[%s378 + $0x20] sm:$0xff]
        %v383 = vld [vmem:[%s378 + $0x30] sm:$0xff]
        %v384 = vld [vmem:[%s378 + $0x38] sm:$0xff]
        %v385 = vld [vmem:[%s378 + $0x48] sm:$0xff]
        %v386 = vld [vmem:[%s378 + $0x50] sm:$0xff]
        %v387 = vld [vmem:[%s378 + $0x60] sm:$0xff]
        %v388 = vld [vmem:[%s378 + $0x68] sm:$0xff]
        %v389 = vld [vmem:[%s378 + $0x78] sm:$0xff]
        %v390 = vld [vmem:[%s378 + $0x80] sm:$0xff]
        %v391 = vld [vmem:[%s378 + $0x90] sm:$0xff]
        %v392 = vld [vmem:[%s378 + $0x98] sm:$0xff]
        %v393 = vld [vmem:[%s378 + $0xa8] sm:$0xff]
        %v394 = vld [vmem:[%s378 + $0xb0] sm:$0xff]
        %v395 = vld [vmem:[%s378 + $0x1] sm:$0xff]
        %v396 = vld [vmem:[%s378 + $0x9] sm:$0xff]
        %v397 = vld [vmem:[%s378 + $0x19] sm:$0xff]
        %v398 = vld [vmem:[%s378 + $0x21] sm:$0xff]
        %v399 = vld [vmem:[%s378 + $0x31] sm:$0xff]
        %v400 = vld [vmem:[%s378 + $0x39] sm:$0xff]
        %v401 = vld [vmem:[%s378 + $0x49] sm:$0xff]
        %v402 = vld [vmem:[%s378 + $0x51] sm:$0xff]
        %v403 = vld [vmem:[%s378 + $0x61] sm:$0xff]
        %v404 = vld [vmem:[%s378 + $0x69] sm:$0xff]
        %v405 = vld [vmem:[%s378 + $0x79] sm:$0xff]
        %v406 = vld [vmem:[%s378 + $0x81] sm:$0xff]
        %v407 = vld [vmem:[%s378 + $0x91] sm:$0xff]
        %v408 = vld [vmem:[%s378 + $0x99] sm:$0xff]
        %v409 = vld [vmem:[%s378 + $0xa9] sm:$0xff]
        %v410 = vld [vmem:[%s378 + $0xb1] sm:$0xff]
        %v411 = vld [vmem:[%s378 + $0x2] sm:$0xff]
        %v412 = vld [vmem:[%s378 + $0xa] sm:$0xff]
        %v413 = vld [vmem:[%s378 + $0x1a] sm:$0xff]
        %v414 = vld [vmem:[%s378 + $0x22] sm:$0xff]
        %v415 = vld [vmem:[%s378 + $0x32] sm:$0xff]
        %v416 = vld [vmem:[%s378 + $0x3a] sm:$0xff]
        %v417 = vld [vmem:[%s378 + $0x4a] sm:$0xff]
        %v418 = vld [vmem:[%s378 + $0x52] sm:$0xff]
        %v419 = vld [vmem:[%s378 + $0x62] sm:$0xff]
        %v420 = vld [vmem:[%s378 + $0x6a] sm:$0xff]
        %v421 = vld [vmem:[%s378 + $0x7a] sm:$0xff]
        %v422 = vld [vmem:[%s378 + $0x82] sm:$0xff]
        %v423 = vld [vmem:[%s378 + $0x92] sm:$0xff]
        %v424 = vld [vmem:[%s378 + $0x9a] sm:$0xff]
        %v425 = vld [vmem:[%s378 + $0xaa] sm:$0xff]
        %v426 = vld [vmem:[%s378 + $0xb2] sm:$0xff]
        %443 = vrot.lane.b32.xlu0 %v298, 4
        %v444 = vpop.permute.xlu0 %443
        %445 = vrot.lane.b32.xlu0 %v299, 4
        %v446 = vpop.permute.xlu0 %445
        %447 = vrot.lane.b32.xlu0 %v300, 4
        %v448 = vpop.permute.xlu0 %447
        %449 = vrot.lane.b32.xlu0 %v301, 4
        %v450 = vpop.permute.xlu0 %449
        %451 = vrot.lane.b32.xlu0 %v302, 4
        %v452 = vpop.permute.xlu0 %451
        %453 = vrot.lane.b32.xlu0 %v303, 4
        %v454 = vpop.permute.xlu0 %453
        %455 = vrot.lane.b32.xlu0 %v304, 4
        %v456 = vpop.permute.xlu0 %455
        %457 = vrot.lane.b32.xlu0 %v305, 4
        %v458 = vpop.permute.xlu0 %457
        %459 = vrot.lane.b32.xlu0 %v306, 4
        %v460 = vpop.permute.xlu0 %459
        %461 = vrot.lane.b32.xlu0 %v307, 4
        %v462 = vpop.permute.xlu0 %461
        %463 = vrot.lane.b32.xlu0 %v308, 4
        %v464 = vpop.permute.xlu0 %463
        %465 = vrot.lane.b32.xlu0 %v309, 4
        %v466 = vpop.permute.xlu0 %465
        %467 = vrot.lane.b32.xlu0 %v310, 4
        %v468 = vpop.permute.xlu0 %467
        %469 = vrot.lane.b32.xlu0 %v311, 4
        %v470 = vpop.permute.xlu0 %469
        %471 = vrot.lane.b32.xlu0 %v312, 4
        %v472 = vpop.permute.xlu0 %471
        %473 = vrot.lane.b32.xlu0 %v313, 4
        %v474 = vpop.permute.xlu0 %473
        %507 = vrot.lane.b32.xlu0 %v314, 8
        %v508 = vpop.permute.xlu0 %507
        %509 = vrot.lane.b32.xlu0 %v315, 8
        %v510 = vpop.permute.xlu0 %509
        %511 = vrot.lane.b32.xlu0 %v316, 8
        %v512 = vpop.permute.xlu0 %511
        %513 = vrot.lane.b32.xlu0 %v317, 8
        %v514 = vpop.permute.xlu0 %513
        %515 = vrot.lane.b32.xlu0 %v318, 8
        %v516 = vpop.permute.xlu0 %515
        %517 = vrot.lane.b32.xlu0 %v319, 8
        %v518 = vpop.permute.xlu0 %517
        %519 = vrot.lane.b32.xlu0 %v320, 8
        %v520 = vpop.permute.xlu0 %519
        %521 = vrot.lane.b32.xlu0 %v321, 8
        %v522 = vpop.permute.xlu0 %521
        %523 = vrot.lane.b32.xlu0 %v322, 8
        %v524 = vpop.permute.xlu0 %523
        %525 = vrot.lane.b32.xlu0 %v323, 8
        %v526 = vpop.permute.xlu0 %525
        %527 = vrot.lane.b32.xlu0 %v324, 8
        %v528 = vpop.permute.xlu0 %527
        %529 = vrot.lane.b32.xlu0 %v325, 8
        %v530 = vpop.permute.xlu0 %529
        %531 = vrot.lane.b32.xlu0 %v326, 8
        %v532 = vpop.permute.xlu0 %531
        %533 = vrot.lane.b32.xlu0 %v327, 8
        %v534 = vpop.permute.xlu0 %533
        %535 = vrot.lane.b32.xlu0 %v328, 8
        %v536 = vpop.permute.xlu0 %535
        %537 = vrot.lane.b32.xlu0 %v329, 8
        %v538 = vpop.permute.xlu0 %537
        %571 = vrot.lane.b32.xlu0 %v330, 12
        %v572 = vpop.permute.xlu0 %571
        %573 = vrot.lane.b32.xlu0 %v331, 12
        %v574 = vpop.permute.xlu0 %573
        %575 = vrot.lane.b32.xlu0 %v332, 12
        %v576 = vpop.permute.xlu0 %575
        %577 = vrot.lane.b32.xlu0 %v333, 12
        %v578 = vpop.permute.xlu0 %577
        %579 = vrot.lane.b32.xlu0 %v334, 12
        %v580 = vpop.permute.xlu0 %579
        %581 = vrot.lane.b32.xlu0 %v335, 12
        %v582 = vpop.permute.xlu0 %581
        %583 = vrot.lane.b32.xlu0 %v336, 12
        %v584 = vpop.permute.xlu0 %583
        %585 = vrot.lane.b32.xlu0 %v337, 12
        %v586 = vpop.permute.xlu0 %585
        %587 = vrot.lane.b32.xlu0 %v338, 12
        %v588 = vpop.permute.xlu0 %587
        %589 = vrot.lane.b32.xlu0 %v339, 12
        %v590 = vpop.permute.xlu0 %589
        %591 = vrot.lane.b32.xlu0 %v340, 12
        %v592 = vpop.permute.xlu0 %591
        %593 = vrot.lane.b32.xlu0 %v341, 12
        %v594 = vpop.permute.xlu0 %593
        %595 = vrot.lane.b32.xlu0 %v342, 12
        %v596 = vpop.permute.xlu0 %595
        %597 = vrot.lane.b32.xlu0 %v343, 12
        %v598 = vpop.permute.xlu0 %597
        %599 = vrot.lane.b32.xlu0 %v344, 12
        %v600 = vpop.permute.xlu0 %599
        %601 = vrot.lane.b32.xlu0 %v345, 12
        %v602 = vpop.permute.xlu0 %601
        %635 = vrot.lane.b32.xlu0 %v346, 16
        %v636 = vpop.permute.xlu0 %635
        %637 = vrot.lane.b32.xlu0 %v347, 16
        %v638 = vpop.permute.xlu0 %637
        %639 = vrot.lane.b32.xlu0 %v348, 16
        %v640 = vpop.permute.xlu0 %639
        %641 = vrot.lane.b32.xlu0 %v349, 16
        %v642 = vpop.permute.xlu0 %641
        %643 = vrot.lane.b32.xlu0 %v350, 16
        %v644 = vpop.permute.xlu0 %643
        %645 = vrot.lane.b32.xlu0 %v351, 16
        %v646 = vpop.permute.xlu0 %645
        %647 = vrot.lane.b32.xlu0 %v352, 16
        %v648 = vpop.permute.xlu0 %647
        %649 = vrot.lane.b32.xlu0 %v353, 16
        %v650 = vpop.permute.xlu0 %649
        %651 = vrot.lane.b32.xlu0 %v354, 16
        %v652 = vpop.permute.xlu0 %651
        %653 = vrot.lane.b32.xlu0 %v355, 16
        %v654 = vpop.permute.xlu0 %653
        %655 = vrot.lane.b32.xlu0 %v356, 16
        %v656 = vpop.permute.xlu0 %655
        %657 = vrot.lane.b32.xlu0 %v357, 16
        %v658 = vpop.permute.xlu0 %657
        %659 = vrot.lane.b32.xlu0 %v358, 16
        %v660 = vpop.permute.xlu0 %659
        %661 = vrot.lane.b32.xlu0 %v359, 16
        %v662 = vpop.permute.xlu0 %661
        %663 = vrot.lane.b32.xlu0 %v360, 16
        %v664 = vpop.permute.xlu0 %663
        %665 = vrot.lane.b32.xlu0 %v361, 16
        %v666 = vpop.permute.xlu0 %665
        %699 = vrot.lane.b32.xlu0 %v362, 20
        %v700 = vpop.permute.xlu0 %699
        %701 = vrot.lane.b32.xlu0 %v363, 20
        %v702 = vpop.permute.xlu0 %701
        %703 = vrot.lane.b32.xlu0 %v364, 20
        %v704 = vpop.permute.xlu0 %703
        %705 = vrot.lane.b32.xlu0 %v365, 20
        %v706 = vpop.permute.xlu0 %705
        %707 = vrot.lane.b32.xlu0 %v366, 20
        %v708 = vpop.permute.xlu0 %707
        %709 = vrot.lane.b32.xlu0 %v367, 20
        %v710 = vpop.permute.xlu0 %709
        %711 = vrot.lane.b32.xlu0 %v368, 20
        %v712 = vpop.permute.xlu0 %711
        %713 = vrot.lane.b32.xlu0 %v369, 20
        %v714 = vpop.permute.xlu0 %713
        %715 = vrot.lane.b32.xlu0 %v370, 20
        %v716 = vpop.permute.xlu0 %715
        %717 = vrot.lane.b32.xlu0 %v371, 20
        %v718 = vpop.permute.xlu0 %717
        %719 = vrot.lane.b32.xlu0 %v372, 20
        %v720 = vpop.permute.xlu0 %719
        %721 = vrot.lane.b32.xlu0 %v373, 20
        %v722 = vpop.permute.xlu0 %721
        %723 = vrot.lane.b32.xlu0 %v374, 20
        %v724 = vpop.permute.xlu0 %723
        %725 = vrot.lane.b32.xlu0 %v375, 20
        %v726 = vpop.permute.xlu0 %725
        %727 = vrot.lane.b32.xlu0 %v376, 20
        %v728 = vpop.permute.xlu0 %727
        %729 = vrot.lane.b32.xlu0 %v377, 20
        %v730 = vpop.permute.xlu0 %729
        %763 = vrot.lane.b32.xlu0 %v379, 24
        %v764 = vpop.permute.xlu0 %763
        %765 = vrot.lane.b32.xlu0 %v380, 24
        %v766 = vpop.permute.xlu0 %765
        %767 = vrot.lane.b32.xlu0 %v381, 24
        %v768 = vpop.permute.xlu0 %767
        %769 = vrot.lane.b32.xlu0 %v382, 24
        %v770 = vpop.permute.xlu0 %769
        %771 = vrot.lane.b32.xlu0 %v383, 24
        %v772 = vpop.permute.xlu0 %771
        %773 = vrot.lane.b32.xlu0 %v384, 24
        %v774 = vpop.permute.xlu0 %773
        %775 = vrot.lane.b32.xlu0 %v385, 24
        %v776 = vpop.permute.xlu0 %775
        %777 = vrot.lane.b32.xlu0 %v386, 24
        %v778 = vpop.permute.xlu0 %777
        %779 = vrot.lane.b32.xlu0 %v387, 24
        %v780 = vpop.permute.xlu0 %779
        %781 = vrot.lane.b32.xlu0 %v388, 24
        %v782 = vpop.permute.xlu0 %781
        %783 = vrot.lane.b32.xlu0 %v389, 24
        %v784 = vpop.permute.xlu0 %783
        %785 = vrot.lane.b32.xlu0 %v390, 24
        %v786 = vpop.permute.xlu0 %785
        %787 = vrot.lane.b32.xlu0 %v391, 24
        %v788 = vpop.permute.xlu0 %787
        %789 = vrot.lane.b32.xlu0 %v392, 24
        %v790 = vpop.permute.xlu0 %789
        %791 = vrot.lane.b32.xlu0 %v393, 24
        %v792 = vpop.permute.xlu0 %791
        %793 = vrot.lane.b32.xlu0 %v394, 24
        %v794 = vpop.permute.xlu0 %793
        %827 = vrot.lane.b32.xlu0 %v395, 28
        %v828 = vpop.permute.xlu0 %827
        %829 = vrot.lane.b32.xlu0 %v396, 28
        %v830 = vpop.permute.xlu0 %829
        %831 = vrot.lane.b32.xlu0 %v397, 28
        %v832 = vpop.permute.xlu0 %831
        %833 = vrot.lane.b32.xlu0 %v398, 28
        %v834 = vpop.permute.xlu0 %833
        %835 = vrot.lane.b32.xlu0 %v399, 28
        %v836 = vpop.permute.xlu0 %835
        %837 = vrot.lane.b32.xlu0 %v400, 28
        %v838 = vpop.permute.xlu0 %837
        %839 = vrot.lane.b32.xlu0 %v401, 28
        %v840 = vpop.permute.xlu0 %839
        %841 = vrot.lane.b32.xlu0 %v402, 28
        %v842 = vpop.permute.xlu0 %841
        %843 = vrot.lane.b32.xlu0 %v403, 28
        %v844 = vpop.permute.xlu0 %843
        %845 = vrot.lane.b32.xlu0 %v404, 28
        %v846 = vpop.permute.xlu0 %845
        %847 = vrot.lane.b32.xlu0 %v405, 28
        %v848 = vpop.permute.xlu0 %847
        %849 = vrot.lane.b32.xlu0 %v406, 28
        %v850 = vpop.permute.xlu0 %849
        %851 = vrot.lane.b32.xlu0 %v407, 28
        %v852 = vpop.permute.xlu0 %851
        %853 = vrot.lane.b32.xlu0 %v408, 28
        %v854 = vpop.permute.xlu0 %853
        %855 = vrot.lane.b32.xlu0 %v409, 28
        %v856 = vpop.permute.xlu0 %855
        %857 = vrot.lane.b32.xlu0 %v410, 28
        %v858 = vpop.permute.xlu0 %857
        %891 = vrot.lane.b32.xlu0 %v411, 32
        %v892 = vpop.permute.xlu0 %891
        %893 = vrot.lane.b32.xlu0 %v412, 32
        %v894 = vpop.permute.xlu0 %893
        %895 = vrot.lane.b32.xlu0 %v413, 32
        %v896 = vpop.permute.xlu0 %895
        %897 = vrot.lane.b32.xlu0 %v414, 32
        %v898 = vpop.permute.xlu0 %897
        %899 = vrot.lane.b32.xlu0 %v415, 32
        %v900 = vpop.permute.xlu0 %899
        %901 = vrot.lane.b32.xlu0 %v416, 32
        %v902 = vpop.permute.xlu0 %901
        %903 = vrot.lane.b32.xlu0 %v417, 32
        %v904 = vpop.permute.xlu0 %903
        %905 = vrot.lane.b32.xlu0 %v418, 32
        %v906 = vpop.permute.xlu0 %905
        %907 = vrot.lane.b32.xlu0 %v419, 32
        %v908 = vpop.permute.xlu0 %907
        %909 = vrot.lane.b32.xlu0 %v420, 32
        %v910 = vpop.permute.xlu0 %909
        %911 = vrot.lane.b32.xlu0 %v421, 32
        %v912 = vpop.permute.xlu0 %911
        %913 = vrot.lane.b32.xlu0 %v422, 32
        %v914 = vpop.permute.xlu0 %913
        %915 = vrot.lane.b32.xlu0 %v423, 32
        %v916 = vpop.permute.xlu0 %915
        %917 = vrot.lane.b32.xlu0 %v424, 32
        %v918 = vpop.permute.xlu0 %917
        %919 = vrot.lane.b32.xlu0 %v425, 32
        %v920 = vpop.permute.xlu0 %919
        %921 = vrot.lane.b32.xlu0 %v426, 32
        %v922 = vpop.permute.xlu0 %921
        %v939 = vsel %vm225, %v282, %v444
        %v940 = vsel %vm225, %v283, %v446
        %v941 = vsel %vm225, %v284, %v448
        %v942 = vsel %vm225, %v285, %v450
        %v943 = vsel %vm225, %v286, %v452
        %v944 = vsel %vm225, %v287, %v454
        %v945 = vsel %vm225, %v288, %v456
        %v946 = vsel %vm225, %v289, %v458
        %v947 = vsel %vm225, %v290, %v460
        %v948 = vsel %vm225, %v291, %v462
        %v949 = vsel %vm225, %v292, %v464
        %v950 = vsel %vm225, %v293, %v466
        %v951 = vsel %vm225, %v294, %v468
        %v952 = vsel %vm225, %v295, %v470
        %v953 = vsel %vm225, %v296, %v472
        %v954 = vsel %vm225, %v297, %v474
        %vm955 = vcmask 64512
        %v956 = vsel %vm955, %v939, %v508
        %v957 = vsel %vm955, %v940, %v510
        %v958 = vsel %vm955, %v941, %v512
        %v959 = vsel %vm955, %v942, %v514
        %v960 = vsel %vm955, %v943, %v516
        %v961 = vsel %vm955, %v944, %v518
        %v962 = vsel %vm955, %v945, %v520
        %v963 = vsel %vm955, %v946, %v522
        %v964 = vsel %vm955, %v947, %v524
        %v965 = vsel %vm955, %v948, %v526
        %v966 = vsel %vm955, %v949, %v528
        %v967 = vsel %vm955, %v950, %v530
        %v968 = vsel %vm955, %v951, %v532
        %v969 = vsel %vm955, %v952, %v534
        %v970 = vsel %vm955, %v953, %v536
        %v971 = vsel %vm955, %v954, %v538
        %vm972 = vcmask 97280
        %v973 = vsel %vm972, %v956, %v572
        %v974 = vsel %vm972, %v957, %v574
        %v975 = vsel %vm972, %v958, %v576
        %v976 = vsel %vm972, %v959, %v578
        %v977 = vsel %vm972, %v960, %v580
        %v978 = vsel %vm972, %v961, %v582
        %v979 = vsel %vm972, %v962, %v584
        %v980 = vsel %vm972, %v963, %v586
        %v981 = vsel %vm972, %v964, %v588
        %v982 = vsel %vm972, %v965, %v590
        %v983 = vsel %vm972, %v966, %v592
        %v984 = vsel %vm972, %v967, %v594
        %v985 = vsel %vm972, %v968, %v596
        %v986 = vsel %vm972, %v969, %v598
        %v987 = vsel %vm972, %v970, %v600
        %v988 = vsel %vm972, %v971, %v602
        %vm989 = vcmask 130048
        %v990 = vsel %vm989, %v973, %v636
        %v991 = vsel %vm989, %v974, %v638
        %v992 = vsel %vm989, %v975, %v640
        %v993 = vsel %vm989, %v976, %v642
        %v994 = vsel %vm989, %v977, %v644
        %v995 = vsel %vm989, %v978, %v646
        %v996 = vsel %vm989, %v979, %v648
        %v997 = vsel %vm989, %v980, %v650
        %v998 = vsel %vm989, %v981, %v652
        %v999 = vsel %vm989, %v982, %v654
        %v1000 = vsel %vm989, %v983, %v656
        %v1001 = vsel %vm989, %v984, %v658
        %v1002 = vsel %vm989, %v985, %v660
        %v1003 = vsel %vm989, %v986, %v662
        %v1004 = vsel %vm989, %v987, %v664
        %v1005 = vsel %vm989, %v988, %v666
        %vm1006 = vcmask 162816
        %v1007 = vsel %vm1006, %v990, %v700
        %v1008 = vsel %vm1006, %v991, %v702
        %v1009 = vsel %vm1006, %v992, %v704
        %v1010 = vsel %vm1006, %v993, %v706
        %v1011 = vsel %vm1006, %v994, %v708
        %v1012 = vsel %vm1006, %v995, %v710
        %v1013 = vsel %vm1006, %v996, %v712
        %v1014 = vsel %vm1006, %v997, %v714
        %v1015 = vsel %vm1006, %v998, %v716
        %v1016 = vsel %vm1006, %v999, %v718
        %v1017 = vsel %vm1006, %v1000, %v720
        %v1018 = vsel %vm1006, %v1001, %v722
        %v1019 = vsel %vm1006, %v1002, %v724
        %v1020 = vsel %vm1006, %v1003, %v726
        %v1021 = vsel %vm1006, %v1004, %v728
        %v1022 = vsel %vm1006, %v1005, %v730
        %vm1023 = vcmask 195584
        %v1024 = vsel %vm1023, %v1007, %v764
        %v1025 = vsel %vm1023, %v1008, %v766
        %v1026 = vsel %vm1023, %v1009, %v768
        %v1027 = vsel %vm1023, %v1010, %v770
        %v1028 = vsel %vm1023, %v1011, %v772
        %v1029 = vsel %vm1023, %v1012, %v774
        %v1030 = vsel %vm1023, %v1013, %v776
        %v1031 = vsel %vm1023, %v1014, %v778
        %v1032 = vsel %vm1023, %v1015, %v780
        %v1033 = vsel %vm1023, %v1016, %v782
        %v1034 = vsel %vm1023, %v1017, %v784
        %v1035 = vsel %vm1023, %v1018, %v786
        %v1036 = vsel %vm1023, %v1019, %v788
        %v1037 = vsel %vm1023, %v1020, %v790
        %v1038 = vsel %vm1023, %v1021, %v792
        %v1039 = vsel %vm1023, %v1022, %v794
        %vm1040 = vcmask 228352
        %v1041 = vsel %vm1040, %v1024, %v828
        %v1042 = vsel %vm1040, %v1025, %v830
        %v1043 = vsel %vm1040, %v1026, %v832
        %v1044 = vsel %vm1040, %v1027, %v834
        %v1045 = vsel %vm1040, %v1028, %v836
        %v1046 = vsel %vm1040, %v1029, %v838
        %v1047 = vsel %vm1040, %v1030, %v840
        %v1048 = vsel %vm1040, %v1031, %v842
        %v1049 = vsel %vm1040, %v1032, %v844
        %v1050 = vsel %vm1040, %v1033, %v846
        %v1051 = vsel %vm1040, %v1034, %v848
        %v1052 = vsel %vm1040, %v1035, %v850
        %v1053 = vsel %vm1040, %v1036, %v852
        %v1054 = vsel %vm1040, %v1037, %v854
        %v1055 = vsel %vm1040, %v1038, %v856
        %v1056 = vsel %vm1040, %v1039, %v858
        %vm1057 = vcmask 261120
        %v1058 = vsel %vm1057, %v1041, %v892
        %v1059 = vsel %vm1057, %v1042, %v894
        %v1060 = vsel %vm1057, %v1043, %v896
        %v1061 = vsel %vm1057, %v1044, %v898
        %v1062 = vsel %vm1057, %v1045, %v900
        %v1063 = vsel %vm1057, %v1046, %v902
        %v1064 = vsel %vm1057, %v1047, %v904
        %v1065 = vsel %vm1057, %v1048, %v906
        %v1066 = vsel %vm1057, %v1049, %v908
        %v1067 = vsel %vm1057, %v1050, %v910
        %v1068 = vsel %vm1057, %v1051, %v912
        %v1069 = vsel %vm1057, %v1052, %v914
        %v1070 = vsel %vm1057, %v1053, %v916
        %v1071 = vsel %vm1057, %v1054, %v918
        %v1072 = vsel %vm1057, %v1055, %v920
        %v1073 = vsel %vm1057, %v1056, %v922
        %v1074 = vld [vmem:[%s1] sm:$0xff]
        %v1075 = vld [vmem:[%s2] sm:$0xff]
        %1077 = vset.pattern.permute.xlu0 0
        %1078 = vperm.xlu0 %1077, %v1075
        %v1079 = vpop.permute.xlu0 %1078
        %vm1081 = vcmask 293888
        %v1083 = vsel %vm1081, %v1074, 0
        %v1086 = vsel %vm1081, %v1058, 0
        %v1089 = vsel %vm1081, %v1059, 0
        %v1092 = vsel %vm1081, %v1060, 0
        %v1095 = vsel %vm1081, %v1061, 0
        %v1098 = vsel %vm1081, %v1062, 0
        %v1101 = vsel %vm1081, %v1063, 0
        %v1104 = vsel %vm1081, %v1064, 0
        %v1107 = vsel %vm1081, %v1065, 0
        %v1110 = vsel %vm1081, %v1066, 0
        %v1113 = vsel %vm1081, %v1067, 0
        %v1116 = vsel %vm1081, %v1068, 0
        %v1119 = vsel %vm1081, %v1069, 0
        %v1122 = vsel %vm1081, %v1070, 0
        %v1125 = vsel %vm1081, %v1071, 0
        %v1128 = vsel %vm1081, %v1072, 0
        %v1131 = vsel %vm1081, %v1073, 0
        %1133 = vmatprep.subr.mxu0 0.0
        %1134 = vmatpush1.xpose.msra.mxu0 %v1086
        %1135 = vmatprep.subr.mxu0 0.0
        %1136 = vmatpush1.xpose.msra.mxu0 %v1089
        %1137 = vmatprep.subr.mxu0 0.0
        %1138 = vmatpush1.xpose.msra.mxu0 %v1092
        %1139 = vmatprep.subr.mxu0 0.0
        %1140 = vmatpush1.xpose.msra.mxu0 %v1095
        %1141 = vmatprep.subr.mxu0 0.0
        %1142 = vmatpush1.xpose.msra.mxu0 %v1098
        %1143 = vmatprep.subr.mxu0 0.0
        %1144 = vmatpush1.xpose.msra.mxu0 %v1101
        %1145 = vmatprep.subr.mxu0 0.0
        %1146 = vmatpush1.xpose.msra.mxu0 %v1104
        %1147 = vmatprep.subr.mxu0 0.0
        %1148 = vmatpush1.xpose.msra.mxu0 %v1107
        %1149 = vmatprep.subr.mxu0 0.0
        %1150 = vmatpush1.xpose.msra.mxu0 %v1110
        %1151 = vmatprep.subr.mxu0 0.0
        %1152 = vmatpush1.xpose.msra.mxu0 %v1113
        %1153 = vmatprep.subr.mxu0 0.0
        %1154 = vmatpush1.xpose.msra.mxu0 %v1116
        %1155 = vmatprep.subr.mxu0 0.0
        %1156 = vmatpush1.xpose.msra.mxu0 %v1119
        %1157 = vmatprep.subr.mxu0 0.0
        %1158 = vmatpush1.xpose.msra.mxu0 %v1122
        %1159 = vmatprep.subr.mxu0 0.0
        %1160 = vmatpush1.xpose.msra.mxu0 %v1125
        %1161 = vmatprep.subr.mxu0 0.0
        %1162 = vmatpush1.xpose.msra.mxu0 %v1128
        %1163 = vmatprep.subr.mxu0 0.0
        %1164 = vmatpush1.xpose.msra.mxu0 %v1131
        %1165 = vmatprep.subr.mxu0 0.0
        %1166 = vmatpush1.xpose.msra.mxu0 0.0
        %1167 = vmatprep.subr.mxu0 0.0
        %1168 = vmatpush1.xpose.msra.mxu0 0.0
        %1169 = vmatprep.subr.mxu0 0.0
        %1170 = vmatpush1.xpose.msra.mxu0 0.0
        %1171 = vmatprep.subr.mxu0 0.0
        %1172 = vmatpush1.xpose.msra.mxu0 0.0
        %1173 = vmatprep.subr.mxu0 0.0
        %1174 = vmatpush1.xpose.msra.mxu0 0.0
        %1175 = vmatprep.subr.mxu0 0.0
        %1176 = vmatpush1.xpose.msra.mxu0 0.0
        %1177 = vmatprep.subr.mxu0 0.0
        %1178 = vmatpush1.xpose.msra.mxu0 0.0
        %1179 = vmatprep.subr.mxu0 0.0
        %1180 = vmatpush1.xpose.msra.mxu0 0.0
        %1181 = vmatprep.subr.mxu0 0.0
        %1182 = vmatpush1.xpose.msra.mxu0 0.0
        %1183 = vmatprep.subr.mxu0 0.0
        %1184 = vmatpush1.xpose.msra.mxu0 0.0
        %1185 = vmatprep.subr.mxu0 0.0
        %1186 = vmatpush1.xpose.msra.mxu0 0.0
        %1187 = vmatprep.subr.mxu0 0.0
        %1188 = vmatpush1.xpose.msra.mxu0 0.0
        %1189 = vmatprep.subr.mxu0 0.0
        %1190 = vmatpush1.xpose.msra.mxu0 0.0
        %1191 = vmatprep.subr.mxu0 0.0
        %1192 = vmatpush1.xpose.msra.mxu0 0.0
        %1193 = vmatprep.subr.mxu0 0.0
        %1194 = vmatpush1.xpose.msra.mxu0 0.0
        %1195 = vmatprep.subr.mxu0 0.0
        %1196 = vmatpush1.xpose.msra.mxu0 0.0
        %1197 = vmatprep.mubr.f32.mxu0 0.0
        %1198 = vmatmul.mubr.f32.gmra.mrb[0].mxu0 %v1083
        %v1199 = vpop.f32.mrb[0].mxu0
        %v1200 = vadd.f32 %v1079, %v1199
        %v1201 = vpop.f32.mrb[0].mxu0
        %1202 = vdwg.mxu0
        %v1203 = vmax.f32 %v1200, 0.0
        %1204 = vst [vmem:[%s177] sm:$0xff] %v1203
        %s1205 = sand.u32 %s107, 1
        %s1206 = scalar_lea.sflag [#allocation4], %s1205
        %s1207 = sand.u32 %s107, 1
        %s1208 = smul.addr %s1207, 8
        %s1209 = scalar_lea.vmem [#allocation3], %s1208
        // Predicated region
        $region33: #{tpu_custom_call.1} parent=31 // pred_check
          %p1210 = pneg %p117
        $region34: #{tpu_custom_call.1} parent=31 // pred_check_branch
          %1212 = sbr.rel (%p1210) target = $region36
        $region35: #{tpu_custom_call.1} parent=31 // pred_region
          %s1214 = ssub.s32 128, 128
          %1215 = vsyncadd %s1206, %s1214
          %s1216 = smul.addr %s21, 2
          %s1217 = sadd.s32 %s22, %s1216
          %s1218 = smul.addr %s1217, 128
          %s1219 = scalar_lea.hbm %s3, %s1218
          %s1221 = sshll.u32 %s1209, 4
          %s1222 = int_to_ptr.vmem [resolvable:$true] %s1221
          %1224 = dma.vmem_to_hbm [thread:$0]  %s1222, 128, %s1219, %s1206
        $region36: #{tpu_custom_call.1} parent=31 // pred_fallthru
          _
      $region32: #{tpu_custom_call.1} parent=5 // pred_fallthru
        _
      %p1225 = scmp.le.s32.totalorder 2, %s12
      // Predicated region
      $region37: #{tpu_custom_call.1} parent=5 // pred_check
        %p1226 = pneg %p1225
      $region38: #{tpu_custom_call.1} parent=5 // pred_check_branch
        %1228 = sbr.rel (%p1226) target = $region40
      $region39: #{tpu_custom_call.1} parent=5 // pred_region
        %s1229 = ssub.s32 %s12, 2
        // Predicated region
        $region41: #{tpu_custom_call.1} parent=39 // pred_check
          %p1230 = pneg %p123
        $region42: #{tpu_custom_call.1} parent=39 // pred_check_branch
          %1232 = sbr.rel (%p1230) target = $region44
        $region43: #{tpu_custom_call.1} parent=39 // pred_region
          %s1233 = sand.u32 %s108, 1
          %s1234 = scalar_lea.sflag [#allocation4], %s1233
          %s1235 = sand.u32 %s108, 1
          %s1236 = smul.addr %s1235, 8
          %s1237 = scalar_lea.vmem [#allocation3], %s1236
          %1238 = dma.done %s1234, 128
        $region44: #{tpu_custom_call.1} parent=39 // pred_fallthru
          _
      $region40: #{tpu_custom_call.1} parent=5 // pred_fallthru
        _
    $region6: #{tpu_custom_call.1} parent=1 // loop_footer
      %s16 = sadd.s32 1, %s12
    $region7: #{tpu_custom_call.1} parent=1 // loop_footer_branch
      %11 = sbr.rel target = $region3
    $region8: #{tpu_custom_call.1} parent=1 // loop_exit
      _
    %1239 = vsyncpa [#allocation4], 1
    %s1240 = scalar_lea.sflag [#allocation4], 1
    %1241 = vsyncpa %s1240, 1

</llo_original>
